<compile_context>
chip_gen: v7x
topology: tpu7x:2x2x1
jax: 0.10.0
libtpu: 0.0.40
codegen_flags: <defaults>
</compile_context>

<pallas_src>
import functools

import numpy as np
import jax
import jax.numpy as jnp
from jax import lax
from jax.experimental import pallas as pl
from jax.experimental.pallas import tpu as pltpu


_VMEM_LIMIT_BYTES = 64 * 1024 * 1024       # safe on v5e/v6e (128 MiB) and v7x (64 MiB)
_ATTN_DTYPE = jnp.bfloat16                 # storage / MXU-operand dtype for Q,K,V
_MXU_DTYPE = jnp.bfloat16                  # GEMM operand dtype (f32 accumulation)


# ------------------------------------------------------------------ #
# Linear (weight-resident) kernels
# ------------------------------------------------------------------ #
def _linear_kernel(x_ref, w_ref, b_ref, o_ref, *, mxu_dtype):
    # x: (TM, Din), w: (Din, TN) [already mxu_dtype], b: (1, TN) f32
    acc = jnp.dot(x_ref[...].astype(mxu_dtype), w_ref[...],
                  preferred_element_type=jnp.float32)
    o_ref[...] = (acc + b_ref[...]).astype(o_ref.dtype)


def pallas_linear(x, w, b, *, out_dtype=jnp.float32, tm=512, tn=512,
                  mxu_dtype=_MXU_DTYPE, weight_resident_bytes=8 * 1024 * 1024):
    """y = x @ w + b.  Weight is kept resident in VMEM when it fits; otherwise
    fall back to (M, N) tiling with 512x512 tiles."""
    M, Din = x.shape
    Dout = w.shape[1]
    w = w.astype(mxu_dtype)
    b2 = b.reshape(1, Dout).astype(jnp.float32)
    TM = M if M <= tm else tm                      # multiple of 8 or full extent
    kernel = functools.partial(_linear_kernel, mxu_dtype=mxu_dtype)

    w_bytes = Din * Dout * jnp.dtype(mxu_dtype).itemsize
    if w_bytes <= weight_resident_bytes:
        # weight resident: grid only over M, weight/bias index_map constant.
        return pl.pallas_call(
            kernel,
            out_shape=jax.ShapeDtypeStruct((M, Dout), out_dtype),
            grid=(pl.cdiv(M, TM),),
            in_specs=[
                pl.BlockSpec((TM, Din), lambda i: (i, 0)),
                pl.BlockSpec((Din, Dout), lambda i: (0, 0)),
                pl.BlockSpec((1, Dout), lambda i: (0, 0)),
            ],
            out_specs=pl.BlockSpec((TM, Dout), lambda i: (i, 0)),
            compiler_params=pltpu.CompilerParams(
                dimension_semantics=("parallel",),
                vmem_limit_bytes=_VMEM_LIMIT_BYTES),
        )(x, w, b2)

    # TODO(synk): for very large Din (>~8k) add K-tiling with an f32 accumulator scratch.
    TN = Dout if Dout <= tn else tn                # multiple of 128 or full extent
    return pl.pallas_call(
        kernel,
        out_shape=jax.ShapeDtypeStruct((M, Dout), out_dtype),
        grid=(pl.cdiv(M, TM), pl.cdiv(Dout, TN)),
        in_specs=[
            pl.BlockSpec((TM, Din), lambda i, j: (i, 0)),
            pl.BlockSpec((Din, TN), lambda i, j: (0, j)),
            pl.BlockSpec((1, TN), lambda i, j: (0, j)),
        ],
        out_specs=pl.BlockSpec((TM, TN), lambda i, j: (i, j)),
        compiler_params=pltpu.CompilerParams(
            dimension_semantics=("parallel", "parallel"),
            vmem_limit_bytes=_VMEM_LIMIT_BYTES),
    )(x, w, b2)


def _fused_qkv_kernel(x_ref, wq_ref, wk_ref, wv_ref, bq_ref, bk_ref, bv_ref,
                      oq_ref, ok_ref, ov_ref, *, mxu_dtype):
    # One activation load, three resident weights, three interleaved stores.
    x = x_ref[...].astype(mxu_dtype)
    oq_ref[...] = (jnp.dot(x, wq_ref[...], preferred_element_type=jnp.float32)
                   + bq_ref[...]).astype(oq_ref.dtype)
    ok_ref[...] = (jnp.dot(x, wk_ref[...], preferred_element_type=jnp.float32)
                   + bk_ref[...]).astype(ok_ref.dtype)
    ov_ref[...] = (jnp.dot(x, wv_ref[...], preferred_element_type=jnp.float32)
                   + bv_ref[...]).astype(ov_ref.dtype)


def pallas_fused_qkv(x, wq, bq, wk, bk, wv, bv, *, out_dtype=_ATTN_DTYPE,
                     tm=512, mxu_dtype=_MXU_DTYPE):
    """Self-attention projection: read x once, produce Q, K, V (out_dtype)."""
    M, Din = x.shape
    Dq, Dk, Dv = wq.shape[1], wk.shape[1], wv.shape[1]
    TM = M if M <= tm else tm
    kernel = functools.partial(_fused_qkv_kernel, mxu_dtype=mxu_dtype)
    return pl.pallas_call(
        kernel,
        out_shape=(jax.ShapeDtypeStruct((M, Dq), out_dtype),
                   jax.ShapeDtypeStruct((M, Dk), out_dtype),
                   jax.ShapeDtypeStruct((M, Dv), out_dtype)),
        grid=(pl.cdiv(M, TM),),
        in_specs=[
            pl.BlockSpec((TM, Din), lambda i: (i, 0)),
            pl.BlockSpec((Din, Dq), lambda i: (0, 0)),
            pl.BlockSpec((Din, Dk), lambda i: (0, 0)),
            pl.BlockSpec((Din, Dv), lambda i: (0, 0)),
            pl.BlockSpec((1, Dq), lambda i: (0, 0)),
            pl.BlockSpec((1, Dk), lambda i: (0, 0)),
            pl.BlockSpec((1, Dv), lambda i: (0, 0)),
        ],
        out_specs=(pl.BlockSpec((TM, Dq), lambda i: (i, 0)),
                   pl.BlockSpec((TM, Dk), lambda i: (i, 0)),
                   pl.BlockSpec((TM, Dv), lambda i: (i, 0))),
        compiler_params=pltpu.CompilerParams(
            dimension_semantics=("parallel",),
            vmem_limit_bytes=_VMEM_LIMIT_BYTES),
    )(x, wq.astype(mxu_dtype), wk.astype(mxu_dtype), wv.astype(mxu_dtype),
      bq.reshape(1, Dq).astype(jnp.float32),
      bk.reshape(1, Dk).astype(jnp.float32),
      bv.reshape(1, Dv).astype(jnp.float32))


# ------------------------------------------------------------------ #
# Chunked attention + fused output projection
# ------------------------------------------------------------------ #
def _chunk_attn_kernel(q_ref, k_ref, v_ref, wo_ref, bo_ref, o_ref, *,
                       h, dq, dv, scale, attention_size, causal):
    # q/k: (TG, C, h*dq) bf16, v: (TG, C, h*dv) bf16
    # wo:  (h*dv, d_model) f32 resident, bo: (1, d_model) f32
    # o:   (TG, C, d_model) f32
    TG, C, _ = q_ref.shape
    d_model = wo_ref.shape[1]

    q = q_ref[...] * scale          # fold 1/sqrt(chunk_size) into q once (bf16)
    k = k_ref[...]
    v = v_ref[...]

    # (C, C) mask from compile-time constants (no mask DMA / extra VMEM buffer).
    masked = None
    if attention_size is not None or causal:
        row = lax.broadcasted_iota(jnp.int32, (C, C), 0)
        col = lax.broadcasted_iota(jnp.int32, (C, C), 1)
        if attention_size is not None and causal:
            masked = (jnp.abs(row - col) > attention_size) | (col > row)
        elif attention_size is not None:
            masked = jnp.abs(row - col) > attention_size
        else:
            masked = col > row
        masked = masked[None, :, :]

    neg_inf = jnp.float32(-jnp.inf)
    # Accumulate the output projection directly: heads @ W_o == sum over heads
    # of head_h @ W_o[h*dv:(h+1)*dv].  No concat, no HBM round-trip of heads,
    # single lane-dense store per grid step.
    acc = jnp.zeros((TG * C, d_model), dtype=jnp.float32)
    for hd in range(h):                                   # static unroll
        qh = q[:, :, hd * dq:(hd + 1) * dq]
        kh = k[:, :, hd * dq:(hd + 1) * dq]
        vh = v[:, :, hd * dv:(hd + 1) * dv]
        # (TG,C,dq) x (TG,C,dq) -> (TG,C,C): bf16 operands, f32 accumulation,
        # contract last dims (no explicit k.T).
        s = lax.dot_general(qh, kh, (((2,), (2,)), ((0,), (0,))),
                            preferred_element_type=jnp.float32)
        if masked is not None:
            s = jnp.where(masked, neg_inf, s)
        s = s - jnp.max(s, axis=-1, keepdims=True)        # stable softmax
        p = jnp.exp(s)
        denom = jnp.sum(p, axis=-1, keepdims=True)
        # (TG,C,C) x (TG,C,dv) -> (TG,C,dv), normalize after the matmul.
        attn_h = lax.dot_general(p.astype(v.dtype), vh, (((2,), (1,)), ((0,), (0,))),
                                 preferred_element_type=jnp.float32)
        attn_h = attn_h * pl.reciprocal(denom, approx=False)
        # Fused output projection slice for this head (f32 for accuracy).
        woh = wo_ref[hd * dv:(hd + 1) * dv, :]            # (dv, d_model)
        acc = acc + jnp.dot(attn_h.reshape(TG * C, dv), woh,
                            preferred_element_type=jnp.float32)
    o_ref[...] = (acc + bo_ref[...]).reshape(TG, C, d_model)


def _choose_tg(G, C, hdq, hdv, d_model, in_itemsize,
               budget_bytes=12 * 1024 * 1024):
    """Pick TG so double-buffered blocks + live intermediates fit the budget."""
    per_group_io = C * (2 * hdq * in_itemsize + hdv * in_itemsize + d_model * 4)
    per_group_live = C * (C + d_model + hdq) * 4          # scores + acc + scaled q
    tg = budget_bytes // (2 * per_group_io + per_group_live)
    tg = int(max(1, min(tg, G, 512)))
    if G >= 16:
        tg = min(tg, max(8, -(-G // 2)))   # keep >=2 grid steps (v7x megacore)
    if tg >= 8:
        tg = (tg // 8) * 8
    return tg


def pallas_chunk_attention_proj(qg, kg, vg, w_o, b_o, *, h, chunk_size,
                                attention_size, causal, tg=None):
    """qg/kg: (G, C, h*dq), vg: (G, C, h*dv) with G = B * n_chunk.
    Computes softmax(q k^T / sqrt(C)) v per chunk+head and applies the output
    projection W_o (resident in VMEM) in the same kernel: returns (G, C, d_model)."""
    G, C, hdq = qg.shape
    hdv = vg.shape[-1]
    d_model = w_o.shape[1]
    dq, dv = hdq // h, hdv // h
    scale = float(1.0 / np.sqrt(chunk_size))

    in_itemsize = jnp.dtype(qg.dtype).itemsize
    TG = tg if tg is not None else _choose_tg(G, C, hdq, hdv, d_model, in_itemsize)
    # Pad G to a multiple of TG so no step softmaxes uninitialised rows.
    Gp = ((G + TG - 1) // TG) * TG
    if Gp != G:
        pad = ((0, Gp - G), (0, 0), (0, 0))
        qg, kg, vg = jnp.pad(qg, pad), jnp.pad(kg, pad), jnp.pad(vg, pad)

    # TODO(synk): if W_o is too large to hold resident in VMEM (huge d_model),
    # fall back to an un-fused epilogue + pallas_linear for the projection.
    kernel = functools.partial(_chunk_attn_kernel, h=h, dq=dq, dv=dv,
                               scale=scale, attention_size=attention_size,
                               causal=causal)
    out = pl.pallas_call(
        kernel,
        out_shape=jax.ShapeDtypeStruct((Gp, C, d_model), jnp.float32),
        grid=(Gp // TG,),
        in_specs=[
            pl.BlockSpec((TG, C, hdq), lambda i: (i, 0, 0)),
            pl.BlockSpec((TG, C, hdq), lambda i: (i, 0, 0)),
            pl.BlockSpec((TG, C, hdv), lambda i: (i, 0, 0)),
            pl.BlockSpec((hdv, d_model), lambda i: (0, 0)),   # W_o resident
            pl.BlockSpec((1, d_model), lambda i: (0, 0)),     # b_o resident
        ],
        out_specs=pl.BlockSpec((TG, C, d_model), lambda i: (i, 0, 0)),
        compiler_params=pltpu.CompilerParams(
            dimension_semantics=("parallel",),
            vmem_limit_bytes=_VMEM_LIMIT_BYTES),
    )(qg, kg, vg, w_o.astype(jnp.float32), b_o.reshape(1, d_model).astype(jnp.float32))
    return out[:G] if Gp != G else out


# ------------------------------------------------------------------ #
# MultiHeadAttentionChunk forward (glue is only free contiguous reshapes)
# ------------------------------------------------------------------ #
def multi_head_attention_chunk(params, query, key, value, *,
                               h, chunk_size, attention_size=None, mask=None):
    """Forward pass of MultiHeadAttentionChunk. Inputs: (B, K, d_model) f32."""
    B, K, d_model = query.shape
    C = chunk_size
    # TODO(synk): last partial chunk (K % chunk_size != 0) not supported; torch
    # .chunk would make the final chunk smaller.
    n_chunk = K // C
    hdq = params["w_q"].shape[1]
    hdv = params["w_v"].shape[1]

    q2d = query.reshape(B * K, d_model)
    if (query is key) and (query is value):
        # self-attention: one pass over the activations, three bf16 outputs.
        q_proj, k_proj, v_proj = pallas_fused_qkv(
            q2d, params["w_q"], params["b_q"], params["w_k"], params["b_k"],
            params["w_v"], params["b_v"], out_dtype=_ATTN_DTYPE)
    else:
        q_proj = pallas_linear(q2d, params["w_q"], params["b_q"], out_dtype=_ATTN_DTYPE)
        k_proj = pallas_linear(key.reshape(B * K, d_model),
                               params["w_k"], params["b_k"], out_dtype=_ATTN_DTYPE)
        v_proj = pallas_linear(value.reshape(B * K, d_model),
                               params["w_v"], params["b_v"], out_dtype=_ATTN_DTYPE)

    # FREE contiguous reshapes: (B*K, h*d) -> (B*n_chunk, C, h*d); no transposes.
    qg = q_proj.reshape(B * n_chunk, C, hdq)
    kg = k_proj.reshape(B * n_chunk, C, hdq)
    vg = v_proj.reshape(B * n_chunk, C, hdv)

    # fused chunked attention + output projection: (B*n_chunk, C, d_model)
    out = pallas_chunk_attention_proj(qg, kg, vg, params["w_o"], params["b_o"],
                                      h=h, chunk_size=C,
                                      attention_size=attention_size,
                                      causal=(mask == "subsequent"))
    return out.reshape(B, K, d_model)


# ------------------------------------------------------------------ #
# Deterministic parameter init (nn.Linear-style uniform) + reference check
# ------------------------------------------------------------------ #
def init_params(key, d_model, q, v, h):
    def linear_init(k, fan_in, fan_out):
        k1, k2 = jax.random.split(k)
        bound = 1.0 / np.sqrt(fan_in)
        w = jax.random.uniform(k1, (fan_in, fan_out), jnp.float32, -bound, bound)
        b = jax.random.uniform(k2, (fan_out,), jnp.float32, -bound, bound)
        return w, b

    k1, k2, k3, k4 = jax.random.split(key, 4)
    w_q, b_q = linear_init(k1, d_model, q * h)
    w_k, b_k = linear_init(k2, d_model, q * h)
    w_v, b_v = linear_init(k3, d_model, v * h)
    w_o, b_o = linear_init(k4, h * v, d_model)
    return dict(w_q=w_q, b_q=b_q, w_k=w_k, b_k=b_k,
                w_v=w_v, b_v=b_v, w_o=w_o, b_o=b_o)


def reference_forward(params, query, key, value, *, h, chunk_size,
                      attention_size=None, mask=None):
    """Pure-jnp f32 transcription of the PyTorch forward for verification."""
    B, K, d_model = query.shape
    C = chunk_size
    n_chunk = K // C
    dq = params["w_q"].shape[1] // h
    dv = params["w_v"].shape[1] // h

    qp = query @ params["w_q"] + params["b_q"]
    kp = key @ params["w_k"] + params["b_k"]
    vp = value @ params["w_v"] + params["b_v"]

    def split(x, d):
        return x.reshape(B, n_chunk, C, h, d)

    qh, kh, vh = split(qp, dq), split(kp, dq), split(vp, dv)
    scores = jnp.einsum("bnchd,bnkhd->bnhck", qh, kh) / np.sqrt(C)
    i_idx, j_idx = jnp.indices((C, C))
    if attention_size is not None:
        scores = jnp.where(jnp.abs(i_idx - j_idx) > attention_size, -jnp.inf, scores)
    if mask == "subsequent":
        scores = jnp.where(j_idx > i_idx, -jnp.inf, scores)
    probs = jax.nn.softmax(scores, axis=-1)
    attn = jnp.einsum("bnhck,bnkhd->bnchd", probs, vh)       # (B, n, C, h, dv)
    heads = attn.reshape(B, K, h * dv)                       # chunk-major time, head-major lanes
    return heads @ params["w_o"] + params["b_o"]


if __name__ == "__main__":
    # small deterministic example: B=2, K=8, d_model=32, q=v=8, h=4, chunk_size=4
    B, K, d_model = 2, 8, 32
    q_dim, v_dim, h = 8, 8, 4
    chunk_size = 4

    root = jax.random.PRNGKey(0)
    kp, kq, kk, kv = jax.random.split(root, 4)
    params = init_params(kp, d_model, q_dim, v_dim, h)
    query = jax.random.normal(kq, (B, K, d_model), jnp.float32)
    key_in = jax.random.normal(kk, (B, K, d_model), jnp.float32)
    value = jax.random.normal(kv, (B, K, d_model), jnp.float32)

    # Tolerance reflects bf16 MXU operands (projection storage + q@k^T and p@v),
    # ~2^-9 relative per rounding, compared against an exact-f32 reference.
    TOL = dict(rtol=2e-2, atol=2e-2)

    # Case 1: distinct q/k/v inputs + local attention mask (3-GEMM path)
    out1 = multi_head_attention_chunk(params, query, key_in, value, h=h,
                                      chunk_size=chunk_size,
                                      attention_size=2, mask=None)
    out1 = jax.block_until_ready(out1)
    ref1 = reference_forward(params, query, key_in, value, h=h,
                             chunk_size=chunk_size, attention_size=2, mask=None)
    np.testing.assert_allclose(np.asarray(out1), np.asarray(ref1), **TOL)

    # Case 2: self-attention (fused QKV kernel) + causal mask
    out2 = multi_head_attention_chunk(params, query, query, query, h=h,
                                      chunk_size=chunk_size,
                                      attention_size=None, mask="subsequent")
    out2 = jax.block_until_ready(out2)
    ref2 = reference_forward(params, query, query, query, h=h,
                             chunk_size=chunk_size, attention_size=None,
                             mask="subsequent")
    np.testing.assert_allclose(np.asarray(out2), np.asarray(ref2), **TOL)

    print("KERNEL_OK")
</pallas_src>

<mosaic_0001>
module attributes {stable_mosaic.version = 11 : i64} {
  func.func @_linear_kernel(%arg0: i32, %arg1: memref<16x32xf32, #tpu.memory_space<vmem>>, %arg2: memref<32x32xbf16, #tpu.memory_space<vmem>>, %arg3: memref<1x32xf32, #tpu.memory_space<vmem>>, %arg4: memref<16x32xbf16, #tpu.memory_space<vmem>>) attributes {dimension_semantics = [#tpu.dimension_semantics<parallel>], iteration_bounds = array<i64: 1>, scalar_prefetch = 0 : i64, scratch_operands = 0 : i64, tpu.core_type = #tpu.core_type<tc>, window_params = [{transform_indices = @transform_0, window_bounds = array<i64: 16, 32>}, {pipeline_mode = #tpu.pipeline_mode<synchronous>, transform_indices = @transform_1, window_bounds = array<i64: 32, 32>}, {pipeline_mode = #tpu.pipeline_mode<synchronous>, transform_indices = @transform_2, window_bounds = array<i64: 1, 32>}, {transform_indices = @transform_3, window_bounds = array<i64: 16, 32>}]} {
    %c0 = arith.constant 0 : index
    %c0_0 = arith.constant 0 : index
    %0 = vector.load %arg1[%c0, %c0_0] : memref<16x32xf32, #tpu.memory_space<vmem>>, vector<16x32xf32>
    %1 = arith.truncf %0 : vector<16x32xf32> to vector<16x32xbf16>
    %c0_1 = arith.constant 0 : index
    %c0_2 = arith.constant 0 : index
    %2 = vector.load %arg2[%c0_1, %c0_2] : memref<32x32xbf16, #tpu.memory_space<vmem>>, vector<32x32xbf16>
    %cst = arith.constant dense<0.000000e+00> : vector<16x32xf32>
    %3 = tpu.matmul %1, %2, %cst {dimension_numbers = #tpu.dot_dimension_numbers<[1], [0], [0], [1], [0, 0, 1, 1], [], []>} : vector<16x32xbf16>, vector<32x32xbf16>, vector<16x32xf32> -> vector<16x32xf32>
    %c0_3 = arith.constant 0 : index
    %c0_4 = arith.constant 0 : index
    %4 = vector.load %arg3[%c0_3, %c0_4] : memref<1x32xf32, #tpu.memory_space<vmem>>, vector<1x32xf32>
    %5 = vector.broadcast %4 : vector<1x32xf32> to vector<16x32xf32>
    %6 = arith.addf %3, %5 : vector<16x32xf32>
    %7 = arith.truncf %6 : vector<16x32xf32> to vector<16x32xbf16>
    %c0_5 = arith.constant 0 : index
    %c0_6 = arith.constant 0 : index
    %8 = vector.load %arg4[%c0_5, %c0_6] : memref<16x32xbf16, #tpu.memory_space<vmem>>, vector<16x32xbf16>
    tpu.vector_store %arg4[%c0_5, %c0_6], %7 {strides = array<i32>} : memref<16x32xbf16, #tpu.memory_space<vmem>>, vector<16x32xbf16>,
    return
  }
  func.func @transform_0(%arg0: i32) -> (i32, i32) {
    %c0_i32 = arith.constant 0 : i32
    %c0_i32_0 = arith.constant 0 : i32
    return %arg0, %c0_i32 : i32, i32
  }
  func.func @transform_1(%arg0: i32) -> (i32, i32) {
    %c0_i32 = arith.constant 0 : i32
    %c0_i32_0 = arith.constant 0 : i32
    %c0_i32_1 = arith.constant 0 : i32
    return %c0_i32, %c0_i32_0 : i32, i32
  }
  func.func @transform_2(%arg0: i32) -> (i32, i32) {
    %c0_i32 = arith.constant 0 : i32
    %c0_i32_0 = arith.constant 0 : i32
    %c0_i32_1 = arith.constant 0 : i32
    return %c0_i32, %c0_i32_0 : i32, i32
  }
  func.func @transform_3(%arg0: i32) -> (i32, i32) {
    %c0_i32 = arith.constant 0 : i32
    %c0_i32_0 = arith.constant 0 : i32
    return %arg0, %c0_i32 : i32, i32
  }
}

</mosaic_0001>

<llo_original>
// kernel: tpu_custom_call.1
$region0: #{tpu_custom_call.1}
  #allocation0 [shape = 'u32[]', space=smem, size = 0x4, offset = 0x4, fixed_abs, tag = 'smem constant byte address 0x4 - core index']
  #allocation1 [shape = 'u32[144,128]{1,0:T(1,128)}', space=vmem, size = 0x12000, scoped, tag = 'internal scratch']
  %s0 = inlined_call_operand.hbm [shape: f32[16,32], index: 0, kind: input, shape index: {}]
  %s1 = inlined_call_operand.hbm [shape: bf16[32,32], index: 1, kind: input, shape index: {}]
  %s2 = inlined_call_operand.hbm [shape: f32[1,32], index: 2, kind: input, shape index: {}]
  %s3 = inlined_call_operand.hbm [shape: bf16[16,32], index: 3, kind: output, shape index: {}]
  %s4 = sld [smem:[#allocation0]]
  $region34: #{tpu_custom_call.1} parent=0
    _
  %s6 = ssub.s32 1, %s4
  %s7 = scalar_select 0, %s6, %s4
  $region1: #{tpu_custom_call.1} parent=0
    #allocation2 [shape = 'u8[8192]{0}', space=vmem, size = 0x2000, scoped, tag = 'input window, operand 0, single buffered']
    #allocation3 [shape = 's32[1]{0}', space=sflag, size = 0x4, scoped, tag = 'scoped memory for tpu_custom_call.1']
    #allocation4 [shape = 's32[1]{0}', space=sflag, size = 0x4, scoped, tag = 'scoped memory for tpu_custom_call.1']
    #allocation5 [shape = 'u8[8192]{0}', space=vmem, size = 0x2000, scoped, tag = 'input window, operand 1, single buffered']
    #allocation6 [shape = 's32[1]{0}', space=sflag, size = 0x4, scoped, tag = 'scoped memory for tpu_custom_call.1']
    #allocation7 [shape = 'u8[512]{0}', space=vmem, size = 0x400, scoped, tag = 'input window, operand 2, single buffered']
    #allocation8 [shape = 'u8[4096]{0}', space=vmem, size = 0x1000, scoped, tag = 'output window, operand 0, single buffered']
    %8 = vsyncpa [#allocation3], 0
    %9 = vsyncpa [#allocation6], 0
    %10 = vsyncpa [#allocation4], 0
    // Predicated region
    $region2: #{tpu_custom_call.1} parent=1 // pred_check
      _
    $region3: #{tpu_custom_call.1} parent=1 // pred_check_branch
      %12 = sbr.rel (0) target = $region5
    $region4: #{tpu_custom_call.1} parent=1 // pred_region
      %s14 = ssub.s32 256, 256
      %15 = vsyncadd [#allocation3], %s14
      %s16 = sshll.u32 [#allocation2], 4
      %s17 = int_to_ptr.vmem [resolvable:$true] %s16
      %22 = dma.hbm_to_vmem [thread:$0]  %s0, 256, %s17, [#allocation3], 128, 128, 8
    $region5: #{tpu_custom_call.1} parent=1 // pred_fallthru
      _
    // Predicated region
    $region6: #{tpu_custom_call.1} parent=1 // pred_check
      _
    $region7: #{tpu_custom_call.1} parent=1 // pred_check_branch
      %24 = sbr.rel (0) target = $region9
    $region8: #{tpu_custom_call.1} parent=1 // pred_region
      %s26 = ssub.s32 256, 256
      %27 = vsyncadd [#allocation6], %s26
      %s28 = sshll.u32 [#allocation5], 4
      %s29 = int_to_ptr.vmem [resolvable:$true] %s28
      %34 = dma.hbm_to_vmem [thread:$0]  %s1, 256, %s29, [#allocation6], 64, 64, 4
    $region9: #{tpu_custom_call.1} parent=1 // pred_fallthru
      _
    // Predicated region
    $region10: #{tpu_custom_call.1} parent=1 // pred_check
      _
    $region11: #{tpu_custom_call.1} parent=1 // pred_check_branch
      %36 = sbr.rel (0) target = $region13
    $region12: #{tpu_custom_call.1} parent=1 // pred_region
      %s38 = ssub.s32 16, 16
      %39 = vsyncadd [#allocation6], %s38
      %s41 = sshll.u32 [#allocation7], 4
      %s42 = int_to_ptr.vmem [resolvable:$true] %s41
      %44 = dma.hbm_to_vmem [thread:$0]  %s2, 16, %s42, [#allocation6]
    $region13: #{tpu_custom_call.1} parent=1 // pred_fallthru
      _
    // Predicated region
    $region14: #{tpu_custom_call.1} parent=1 // pred_check
      _
    $region15: #{tpu_custom_call.1} parent=1 // pred_check_branch
      %46 = sbr.rel (0) target = $region17
    $region16: #{tpu_custom_call.1} parent=1 // pred_region
      %47 = dma.done [#allocation3], 256
    $region17: #{tpu_custom_call.1} parent=1 // pred_fallthru
      _
    // Predicated region
    $region18: #{tpu_custom_call.1} parent=1 // pred_check
      _
    $region19: #{tpu_custom_call.1} parent=1 // pred_check_branch
      %49 = sbr.rel (0) target = $region21
    $region20: #{tpu_custom_call.1} parent=1 // pred_region
      %50 = dma.done [#allocation6], 256
    $region21: #{tpu_custom_call.1} parent=1 // pred_fallthru
      _
    // Predicated region
    $region22: #{tpu_custom_call.1} parent=1 // pred_check
      _
    $region23: #{tpu_custom_call.1} parent=1 // pred_check_branch
      %52 = sbr.rel (0) target = $region25
    $region24: #{tpu_custom_call.1} parent=1 // pred_region
      %53 = dma.done [#allocation6], 16
    $region25: #{tpu_custom_call.1} parent=1 // pred_fallthru
      _
    %v55 = vld [vmem:[#allocation2] sm:$0xff]
    %v56 = vld [vmem:[#allocation2 + $0x8] sm:$0xff]
    %v57 = vpack.c.bf16 %v56, %v55
    %v58 = vld [vmem:[#allocation5] sm:$0xf]
    %v59 = vld [vmem:[#allocation5 + $0x4] sm:$0xf]
    %v60 = vld [vmem:[#allocation5 + $0x8] sm:$0xf]
    %v61 = vld [vmem:[#allocation5 + $0xc] sm:$0xf]
    %v62 = vld [vmem:[#allocation7] sm:$0x1]
    %v64 = vlaneseq
    %v65 = vshrl.u32 %v64, 7
    %v66 = vsub.s32 0, %v65
    %v67 = vrot.slane %v62, %v66
    %v73 = vunpack.c.l.b16 %v58
    %v74 = vunpack.c.l.b16 %v59
    %v75 = vunpack.c.l.b16 %v60
    %v76 = vunpack.c.l.b16 %v61
    %v77 = vpack.c.b16 %v74, %v73
    %v78 = vpack.c.b16 %v76, %v75
    %vm81 = vcmask 261120
    %v83 = vsel %vm81, %v57, 0
    %85 = vmatprep.subr.bf16.mxu0 0
    %86 = vmatpush1.bf16.msra.mxu0 %v77
    %87 = vmatprep.subr.bf16.mxu0 0
    %88 = vmatpush1.bf16.msra.mxu0 %v78
    %89 = vmatprep.subr.bf16.mxu0 0
    %90 = vmatpush1.bf16.msra.mxu0 0
    %91 = vmatprep.subr.bf16.mxu0 0
    %92 = vmatpush1.bf16.msra.mxu0 0
    %93 = vmatprep.subr.bf16.mxu0 0
    %94 = vmatpush1.bf16.msra.mxu0 0
    %95 = vmatprep.subr.bf16.mxu0 0
    %96 = vmatpush1.bf16.msra.mxu0 0
    %97 = vmatprep.subr.bf16.mxu0 0
    %98 = vmatpush1.bf16.msra.mxu0 0
    %99 = vmatprep.subr.bf16.mxu0 0
    %100 = vmatpush1.bf16.msra.mxu0 0
    %101 = vmatprep.subr.bf16.mxu0 0
    %102 = vmatpush1.bf16.msra.mxu0 0
    %103 = vmatprep.subr.bf16.mxu0 0
    %104 = vmatpush1.bf16.msra.mxu0 0
    %105 = vmatprep.subr.bf16.mxu0 0
    %106 = vmatpush1.bf16.msra.mxu0 0
    %107 = vmatprep.subr.bf16.mxu0 0
    %108 = vmatpush1.bf16.msra.mxu0 0
    %109 = vmatprep.subr.bf16.mxu0 0
    %110 = vmatpush1.bf16.msra.mxu0 0
    %111 = vmatprep.subr.bf16.mxu0 0
    %112 = vmatpush1.bf16.msra.mxu0 0
    %113 = vmatprep.subr.bf16.mxu0 0
    %114 = vmatpush1.bf16.msra.mxu0 0
    %115 = vmatprep.subr.bf16.mxu0 0
    %116 = vmatpush1.bf16.msra.mxu0 0
    %117 = vmatprep.mubr.bf16.mxu0 0
    %118 = vmatmul.mubr.bf16.gmra.mrb[0].mxu0 %v83
    %v119 = vpop.f32.mrb[0].mxu0
    %v120 = vadd.f32 %v67, %v119
    %v121 = vpop.f32.mrb[0].mxu0
    %v122 = vpop.f32.mrb[0].mxu0
    %v123 = vadd.f32 %v67, %v122
    %v124 = vpop.f32.mrb[0].mxu0
    %125 = vdwg.mxu0
    %v126 = vpack.c.bf16 %v123, %v120
    %v128 = vunpack.c.l.b16 %v126
    %v129 = vunpack.c.h.b16 %v126
    %v130 = vpack.c.b16 %v128, %v128
    %v131 = vpack.c.b16 %v129, %v129
    %vm134 = vcmask 257024
    %135 = vst.msk [vmem:[#allocation8] sm:$0xf] %vm134, %v130
    %136 = vst.msk [vmem:[#allocation8 + $0x4] sm:$0xf] %vm134, %v131
    // Predicated region
    $region26: #{tpu_custom_call.1} parent=1 // pred_check
      _
    $region27: #{tpu_custom_call.1} parent=1 // pred_check_branch
      %138 = sbr.rel (0) target = $region29
    $region28: #{tpu_custom_call.1} parent=1 // pred_region
      %s140 = ssub.s32 128, 128
      %141 = vsyncadd [#allocation4], %s140
      %s142 = sshll.u32 [#allocation8], 4
      %s143 = int_to_ptr.vmem [resolvable:$true] %s142
      %148 = dma.vmem_to_hbm [thread:$0]  %s143, 128, %s3, [#allocation4], 64, 64, 4
    $region29: #{tpu_custom_call.1} parent=1 // pred_fallthru
      _
    // Predicated region
    $region30: #{tpu_custom_call.1} parent=1 // pred_check
      _
    $region31: #{tpu_custom_call.1} parent=1 // pred_check_branch
      %150 = sbr.rel (0) target = $region33
    $region32: #{tpu_custom_call.1} parent=1 // pred_region
      %151 = dma.done [#allocation4], 128
    $region33: #{tpu_custom_call.1} parent=1 // pred_fallthru
      _
    %152 = vsyncpa [#allocation3], 1
    %153 = vsyncpa [#allocation6], 1
    %154 = vsyncpa [#allocation4], 1

</llo_original>
